<compile_context>
chip_gen: v7x
topology: tpu7x:2x2x1
jax: 0.10.0
libtpu: 0.0.40
codegen_flags: <defaults>
</compile_context>

<pallas_src>
import functools
import math

import jax
import jax.numpy as jnp
from jax import lax
from jax.experimental import pallas as pl
from jax.experimental.pallas import tpu as pltpu

H1 = 64
H2 = 32
LANE = 128            # lane width
SUBLANE = 8           # sublane width (f32)
MAX_SUB_ROWS = 256    # per-sub-chunk row count inside the kernel (narrow output)
MIN_SPLIT_ROWS = 512  # only split the batch across >=2 grid steps above this size
DEFAULT_TILE = 4096   # requested batch tile (clamped by the VMEM budget)


def _round_up(x, m):
    return ((x + m - 1) // m) * m


def _vmem_capacity_bytes():
    """Physical VMEM of the current chip; conservative v7x fallback (64 MiB)."""
    try:
        return int(pltpu.get_tpu_info().vmem_capacity_bytes)
    except Exception:
        return 64 * 1024 * 1024


def _vmem_array_bytes(shape, itemsize):
    """VMEM footprint of a 2-D array incl. (8,128) layout padding."""
    rows = _round_up(shape[0], SUBLANE)
    cols = _round_up(shape[-1], LANE)
    return rows * cols * itemsize


def mlp_kernel(x_ref, w1_ref, b1_ref, w2_ref, b2_ref, w3_ref, b3_ref, o_ref,
               *, sub_rows, num_sub):
    # Weights are fully VMEM-resident; load once per grid step.
    w1 = w1_ref[...]
    w2 = w2_ref[...]
    w3 = w3_ref[...]
    # Hoist the bias broadcasts out of the (unrolled) sub-chunk loop — JAX does
    # not CSE broadcast_in_dim, so doing it inside compute() would re-emit it
    # once per unrolled iteration.
    b1 = jnp.broadcast_to(b1_ref[...], (sub_rows, w1.shape[1]))
    b2 = jnp.broadcast_to(b2_ref[...], (sub_rows, w2.shape[1]))
    b3 = jnp.broadcast_to(b3_ref[...], (sub_rows, w3.shape[1]))

    def compute(x):
        h1 = jnp.dot(x, w1, preferred_element_type=jnp.float32) + b1
        h1 = jnp.maximum(h1, 0.0)      # ReLU (Dropout -> identity in eval mode)
        h2 = jnp.dot(h1, w2, preferred_element_type=jnp.float32) + b2
        h2 = jnp.maximum(h2, 0.0)      # ReLU (Dropout -> identity in eval mode)
        return jnp.dot(h2, w3, preferred_element_type=jnp.float32) + b3

    if num_sub == 1:
        # Whole tile in one shot (tiny-batch / single-chunk path).
        o_ref[...] = compute(x_ref[...]).astype(o_ref.dtype)
    else:
        # Sub-chunk the tile to bound vreg live ranges; modest unroll for LLO
        # scheduler visibility without code bloat at large num_sub.
        def body(i, carry):
            r = pl.multiple_of(i * sub_rows, sub_rows)
            x = x_ref[pl.ds(r, sub_rows), :]
            o_ref[pl.ds(r, sub_rows), :] = compute(x).astype(o_ref.dtype)
            return carry

        lax.fori_loop(0, num_sub, body, 0, unroll=min(num_sub, 8))


def mlp_forward(x, params, *, batch_tile=DEFAULT_TILE):
    """x: (B, D_in). params: dict with w1,b1,w2,b2,w3,b3 (weights as (in, out))."""
    B, D_in = x.shape
    D_out = params["w3"].shape[1]
    out_dtype = x.dtype
    x_itemsize = x.dtype.itemsize
    out_itemsize = jnp.dtype(out_dtype).itemsize

    # ---- output column padding: only when D_out is already wide (>= 64) ----
    # For tiny D_out an unpadded (narrow) output block keeps the dominant HBM
    # write stream at its useful size; the masked-vst cost is irrelevant here.
    if D_out >= 64:
        D_out_store = _round_up(D_out, LANE)
    else:
        D_out_store = D_out

    w3 = params["w3"]
    b3 = params["b3"].reshape(1, D_out)
    if D_out_store != D_out:
        w3 = jnp.pad(w3, ((0, 0), (0, D_out_store - D_out)))
        b3 = jnp.pad(b3, ((0, 0), (0, D_out_store - D_out)))

    w1 = params["w1"]
    w2 = params["w2"]
    b1 = params["b1"].reshape(1, H1)
    b2 = params["b2"].reshape(1, H2)

    # ---- tile sizing from the VMEM budget (lane padding included) ----
    row_align = SUBLANE if x_itemsize >= 4 else 16   # packed sublanes for bf16/int8
    x_lane = _round_up(D_in, LANE)
    o_lane = _round_up(D_out_store, LANE)
    # Per-row VMEM cost of one x block + one out block (lanes pad to 128).
    bytes_per_row = x_lane * x_itemsize + o_lane * out_itemsize

    vmem_phys = _vmem_capacity_bytes()
    tile_budget = vmem_phys // 4                      # for the double-buffered tiles
    tile_cap = max(row_align,
                   (tile_budget // (2 * bytes_per_row)) // row_align * row_align)

    tile = min(batch_tile, tile_cap)
    tile = max(row_align, (tile // row_align) * row_align)
    # Never exceed the (rounded-up) batch.
    tile = min(tile, _round_up(B, row_align))
    # v7x megacore: guarantee >= 2 grid steps when the batch is big enough so the
    # "parallel" grid axis actually shards across both TensorCores.
    half = _round_up(pl.cdiv(B, 2), row_align)
    if half >= MIN_SPLIT_ROWS:
        tile = min(tile, half)
    # Make the tile sub-chunkable inside the kernel.
    if tile > MAX_SUB_ROWS:
        tile = (tile // MAX_SUB_ROWS) * MAX_SUB_ROWS
    sub_rows = min(tile, MAX_SUB_ROWS)
    num_sub = tile // sub_rows

    # Pad the batch so the grid needs no masking; slice the rows back after.
    B_pad = _round_up(B, tile)
    if B_pad != B:
        x = jnp.pad(x, ((0, B_pad - B), (0, 0)))

    grid = (B_pad // tile,)
    kernel = functools.partial(mlp_kernel, sub_rows=sub_rows, num_sub=num_sub)

    # ---- explicit VMEM limit: double-buffered tiles + resident weights + headroom ----
    weights_vmem = (
        _vmem_array_bytes((D_in, H1), 4) + _vmem_array_bytes((1, H1), 4)
        + _vmem_array_bytes((H1, H2), 4) + _vmem_array_bytes((1, H2), 4)
        + _vmem_array_bytes((H2, D_out_store), 4) + _vmem_array_bytes((1, D_out_store), 4)
    )
    tiles_vmem = 2 * tile * bytes_per_row
    vmem_limit = int(min(max(tiles_vmem + weights_vmem + (16 << 20), 32 << 20),
                         vmem_phys - (8 << 20)))

    # Untiled, VMEM-resident specs for the (small) weights and biases.
    vmem_full = pl.BlockSpec(memory_space=pltpu.MemorySpace.VMEM)

    out = pl.pallas_call(
        kernel,
        out_shape=jax.ShapeDtypeStruct((B_pad, D_out_store), out_dtype),
        grid_spec=pltpu.PrefetchScalarGridSpec(
            num_scalar_prefetch=0,
            grid=grid,
            in_specs=[
                pl.BlockSpec((tile, D_in), lambda i: (i, 0)),   # x batch tile
                vmem_full,   # w1
                vmem_full,   # b1
                vmem_full,   # w2
                vmem_full,   # b2
                vmem_full,   # w3 (possibly lane-padded)
                vmem_full,   # b3 (possibly lane-padded)
            ],
            out_specs=pl.BlockSpec((tile, D_out_store), lambda i: (i, 0)),
        ),
        compiler_params=pltpu.CompilerParams(
            dimension_semantics=("parallel",),
            vmem_limit_bytes=vmem_limit,
        ),
    )(x, w1, b1, w2, b2, w3, b3)

    return out[:B, :D_out]


def init_params(key, input_dim, output_dim):
    """Deterministic init mimicking torch.nn.Linear default (U[-1/sqrt(fan_in), +])."""
    ks = jax.random.split(key, 6)

    def linear(kw, kb, fan_in, fan_out):
        bound = 1.0 / math.sqrt(fan_in)
        w = jax.random.uniform(kw, (fan_in, fan_out), jnp.float32, -bound, bound)
        b = jax.random.uniform(kb, (fan_out,), jnp.float32, -bound, bound)
        return w, b

    w1, b1 = linear(ks[0], ks[1], input_dim, H1)
    w2, b2 = linear(ks[2], ks[3], H1, H2)
    w3, b3 = linear(ks[4], ks[5], H2, output_dim)
    return {"w1": w1, "b1": b1, "w2": w2, "b2": b2, "w3": w3, "b3": b3}


def mlp_ref(x, p):
    """Pure-JAX reference for correctness check (eval-mode forward)."""
    h = jnp.maximum(x @ p["w1"] + p["b1"], 0.0)
    h = jnp.maximum(h @ p["w2"] + p["b2"], 0.0)
    return h @ p["w3"] + p["b3"]


if __name__ == "__main__":
    key = jax.random.PRNGKey(0)
    k_param, k_x = jax.random.split(key)

    batch, input_dim, output_dim = 8, 16, 4
    params = init_params(k_param, input_dim, output_dim)
    x = jax.random.normal(k_x, (batch, input_dim), jnp.float32)

    out = mlp_forward(x, params)
    out = jax.block_until_ready(out)

    ref = mlp_ref(x, params)
    assert out.shape == (batch, output_dim)
    assert jnp.allclose(out, ref, atol=1e-5, rtol=1e-5), "mismatch vs reference"

    print("KERNEL_OK")
</pallas_src>

<mosaic_0001>
module attributes {stable_mosaic.version = 11 : i64} {
  func.func @mlp_kernel(%arg0: i32, %arg1: memref<8x16xf32, #tpu.memory_space<vmem>>, %arg2: memref<16x64xf32, #tpu.memory_space<vmem>>, %arg3: memref<1x64xf32, #tpu.memory_space<vmem>>, %arg4: memref<64x32xf32, #tpu.memory_space<vmem>>, %arg5: memref<1x32xf32, #tpu.memory_space<vmem>>, %arg6: memref<32x4xf32, #tpu.memory_space<vmem>>, %arg7: memref<1x4xf32, #tpu.memory_space<vmem>>, %arg8: memref<8x4xf32, #tpu.memory_space<vmem>>) attributes {dimension_semantics = [#tpu.dimension_semantics<parallel>], iteration_bounds = array<i64: 1>, scalar_prefetch = 0 : i64, scratch_operands = 0 : i64, tpu.core_type = #tpu.core_type<tc>, window_params = [{transform_indices = @transform_0, window_bounds = array<i64: 8, 16>}, {pipeline_mode = #tpu.pipeline_mode<synchronous>, transform_indices = @transform_1, window_bounds = array<i64: 16, 64>}, {pipeline_mode = #tpu.pipeline_mode<synchronous>, transform_indices = @transform_2, window_bounds = array<i64: 1, 64>}, {pipeline_mode = #tpu.pipeline_mode<synchronous>, transform_indices = @transform_3, window_bounds = array<i64: 64, 32>}, {pipeline_mode = #tpu.pipeline_mode<synchronous>, transform_indices = @transform_4, window_bounds = array<i64: 1, 32>}, {pipeline_mode = #tpu.pipeline_mode<synchronous>, transform_indices = @transform_5, window_bounds = array<i64: 32, 4>}, {pipeline_mode = #tpu.pipeline_mode<synchronous>, transform_indices = @transform_6, window_bounds = array<i64: 1, 4>}, {transform_indices = @transform_7, window_bounds = array<i64: 8, 4>}]} {
    %c0 = arith.constant 0 : index
    %c0_0 = arith.constant 0 : index
    %0 = vector.load %arg2[%c0, %c0_0] : memref<16x64xf32, #tpu.memory_space<vmem>>, vector<16x64xf32>
    %c0_1 = arith.constant 0 : index
    %c0_2 = arith.constant 0 : index
    %1 = vector.load %arg4[%c0_1, %c0_2] : memref<64x32xf32, #tpu.memory_space<vmem>>, vector<64x32xf32>
    %c0_3 = arith.constant 0 : index
    %c0_4 = arith.constant 0 : index
    %2 = vector.load %arg6[%c0_3, %c0_4] : memref<32x4xf32, #tpu.memory_space<vmem>>, vector<32x4xf32>
    %c0_5 = arith.constant 0 : index
    %c0_6 = arith.constant 0 : index
    %3 = vector.load %arg3[%c0_5, %c0_6] : memref<1x64xf32, #tpu.memory_space<vmem>>, vector<1x64xf32>
    %4 = vector.shape_cast %3 : vector<1x64xf32> to vector<1x64xf32>
    %5 = vector.broadcast %4 : vector<1x64xf32> to vector<8x64xf32>
    %c0_7 = arith.constant 0 : index
    %c0_8 = arith.constant 0 : index
    %6 = vector.load %arg5[%c0_7, %c0_8] : memref<1x32xf32, #tpu.memory_space<vmem>>, vector<1x32xf32>
    %7 = vector.shape_cast %6 : vector<1x32xf32> to vector<1x32xf32>
    %8 = vector.broadcast %7 : vector<1x32xf32> to vector<8x32xf32>
    %c0_9 = arith.constant 0 : index
    %c0_10 = arith.constant 0 : index
    %9 = vector.load %arg7[%c0_9, %c0_10] : memref<1x4xf32, #tpu.memory_space<vmem>>, vector<1x4xf32>
    %10 = vector.shape_cast %9 : vector<1x4xf32> to vector<1x4xf32>
    %11 = vector.broadcast %10 : vector<1x4xf32> to vector<8x4xf32>
    %c0_11 = arith.constant 0 : index
    %c0_12 = arith.constant 0 : index
    %12 = vector.load %arg1[%c0_11, %c0_12] : memref<8x16xf32, #tpu.memory_space<vmem>>, vector<8x16xf32>
    %cst = arith.constant dense<0.000000e+00> : vector<8x64xf32>
    %13 = tpu.matmul %12, %0, %cst {dimension_numbers = #tpu.dot_dimension_numbers<[1], [0], [0], [1], [0, 0, 1, 1], [], []>} : vector<8x16xf32>, vector<16x64xf32>, vector<8x64xf32> -> vector<8x64xf32>
    %14 = arith.addf %13, %5 : vector<8x64xf32>
    %cst_13 = arith.constant 0.000000e+00 : f32
    %15 = vector.broadcast %cst_13 : f32 to vector<8x64xf32>
    %16 = arith.maximumf %14, %15 : vector<8x64xf32>
    %cst_14 = arith.constant dense<0.000000e+00> : vector<8x32xf32>
    %17 = tpu.matmul %16, %1, %cst_14 {dimension_numbers = #tpu.dot_dimension_numbers<[1], [0], [0], [1], [0, 0, 1, 1], [], []>} : vector<8x64xf32>, vector<64x32xf32>, vector<8x32xf32> -> vector<8x32xf32>
    %18 = arith.addf %17, %8 : vector<8x32xf32>
    %cst_15 = arith.constant 0.000000e+00 : f32
    %19 = vector.broadcast %cst_15 : f32 to vector<8x32xf32>
    %20 = arith.maximumf %18, %19 : vector<8x32xf32>
    %cst_16 = arith.constant dense<0.000000e+00> : vector<8x4xf32>
    %21 = tpu.matmul %20, %2, %cst_16 {dimension_numbers = #tpu.dot_dimension_numbers<[1], [0], [0], [1], [0, 0, 1, 1], [], []>} : vector<8x32xf32>, vector<32x4xf32>, vector<8x4xf32> -> vector<8x4xf32>
    %22 = arith.addf %21, %11 : vector<8x4xf32>
    %c0_17 = arith.constant 0 : index
    %c0_18 = arith.constant 0 : index
    %23 = vector.load %arg8[%c0_17, %c0_18] : memref<8x4xf32, #tpu.memory_space<vmem>>, vector<8x4xf32>
    tpu.vector_store %arg8[%c0_17, %c0_18], %22 {strides = array<i32>} : memref<8x4xf32, #tpu.memory_space<vmem>>, vector<8x4xf32>,
    return
  }
  func.func @transform_0(%arg0: i32) -> (i32, i32) {
    %c0_i32 = arith.constant 0 : i32
    %c0_i32_0 = arith.constant 0 : i32
    return %arg0, %c0_i32 : i32, i32
  }
  func.func @transform_1(%arg0: i32) -> (i32, i32) {
    %c0_i32 = arith.constant 0 : i32
    %c0_i32_0 = arith.constant 0 : i32
    %c0_i32_1 = arith.constant 0 : i32
    return %c0_i32, %c0_i32_0 : i32, i32
  }
  func.func @transform_2(%arg0: i32) -> (i32, i32) {
    %c0_i32 = arith.constant 0 : i32
    %c0_i32_0 = arith.constant 0 : i32
    %c0_i32_1 = arith.constant 0 : i32
    return %c0_i32, %c0_i32_0 : i32, i32
  }
  func.func @transform_3(%arg0: i32) -> (i32, i32) {
    %c0_i32 = arith.constant 0 : i32
    %c0_i32_0 = arith.constant 0 : i32
    %c0_i32_1 = arith.constant 0 : i32
    return %c0_i32, %c0_i32_0 : i32, i32
  }
  func.func @transform_4(%arg0: i32) -> (i32, i32) {
    %c0_i32 = arith.constant 0 : i32
    %c0_i32_0 = arith.constant 0 : i32
    %c0_i32_1 = arith.constant 0 : i32
    return %c0_i32, %c0_i32_0 : i32, i32
  }
  func.func @transform_5(%arg0: i32) -> (i32, i32) {
    %c0_i32 = arith.constant 0 : i32
    %c0_i32_0 = arith.constant 0 : i32
    %c0_i32_1 = arith.constant 0 : i32
    return %c0_i32, %c0_i32_0 : i32, i32
  }
  func.func @transform_6(%arg0: i32) -> (i32, i32) {
    %c0_i32 = arith.constant 0 : i32
    %c0_i32_0 = arith.constant 0 : i32
    %c0_i32_1 = arith.constant 0 : i32
    return %c0_i32, %c0_i32_0 : i32, i32
  }
  func.func @transform_7(%arg0: i32) -> (i32, i32) {
    %c0_i32 = arith.constant 0 : i32
    %c0_i32_0 = arith.constant 0 : i32
    return %arg0, %c0_i32 : i32, i32
  }
}

</mosaic_0001>

<llo_original>
// kernel: tpu_custom_call.1
$region0: #{tpu_custom_call.1}
  #allocation0 [shape = 'u32[]', space=smem, size = 0x4, offset = 0x4, fixed_abs, tag = 'smem constant byte address 0x4 - core index']
  #allocation1 [shape = 'u32[144,128]{1,0:T(1,128)}', space=vmem, size = 0x12000, scoped, tag = 'internal scratch']
  %s0 = inlined_call_operand.vmem [shape: f32[8,16], index: 0, kind: input, shape index: {}]
  %s1 = inlined_call_operand.vmem [shape: f32[16,64], index: 1, kind: input, shape index: {}]
  %s2 = inlined_call_operand.vmem [shape: f32[1,64], index: 2, kind: input, shape index: {}]
  %s3 = inlined_call_operand.vmem [shape: f32[64,32], index: 3, kind: input, shape index: {}]
  %s4 = inlined_call_operand.vmem [shape: f32[1,32], index: 4, kind: input, shape index: {}]
  %s5 = inlined_call_operand.vmem [shape: f32[32,4], index: 5, kind: input, shape index: {}]
  %s6 = inlined_call_operand.vmem [shape: f32[1,4], index: 6, kind: input, shape index: {}]
  %s7 = inlined_call_operand.vmem [shape: f32[8,4], index: 7, kind: output, shape index: {}]
  %s8 = sld [smem:[#allocation0]]
  $region38: #{tpu_custom_call.1} parent=0
    _
  %s10 = ssub.s32 1, %s8
  %s11 = scalar_select 0, %s10, %s8
  // Predicated region
  $region2: #{tpu_custom_call.1} parent=0 // pred_check
    _
  $region3: #{tpu_custom_call.1} parent=0 // pred_check_branch
    %13 = sbr.rel (0) target = $region5
  $region4: #{tpu_custom_call.1} parent=0 // pred_region
    _
  $region5: #{tpu_custom_call.1} parent=0 // pred_fallthru
    _
  // Predicated region
  $region6: #{tpu_custom_call.1} parent=0 // pred_check
    _
  $region7: #{tpu_custom_call.1} parent=0 // pred_check_branch
    %15 = sbr.rel (0) target = $region9
  $region8: #{tpu_custom_call.1} parent=0 // pred_region
    _
  $region9: #{tpu_custom_call.1} parent=0 // pred_fallthru
    _
  // Predicated region
  $region10: #{tpu_custom_call.1} parent=0 // pred_check
    _
  $region11: #{tpu_custom_call.1} parent=0 // pred_check_branch
    %17 = sbr.rel (0) target = $region13
  $region12: #{tpu_custom_call.1} parent=0 // pred_region
    _
  $region13: #{tpu_custom_call.1} parent=0 // pred_fallthru
    _
  // Predicated region
  $region14: #{tpu_custom_call.1} parent=0 // pred_check
    _
  $region15: #{tpu_custom_call.1} parent=0 // pred_check_branch
    %19 = sbr.rel (0) target = $region17
  $region16: #{tpu_custom_call.1} parent=0 // pred_region
    _
  $region17: #{tpu_custom_call.1} parent=0 // pred_fallthru
    _
  // Predicated region
  $region18: #{tpu_custom_call.1} parent=0 // pred_check
    _
  $region19: #{tpu_custom_call.1} parent=0 // pred_check_branch
    %21 = sbr.rel (0) target = $region21
  $region20: #{tpu_custom_call.1} parent=0 // pred_region
    _
  $region21: #{tpu_custom_call.1} parent=0 // pred_fallthru
    _
  // Predicated region
  $region22: #{tpu_custom_call.1} parent=0 // pred_check
    _
  $region23: #{tpu_custom_call.1} parent=0 // pred_check_branch
    %23 = sbr.rel (0) target = $region25
  $region24: #{tpu_custom_call.1} parent=0 // pred_region
    _
  $region25: #{tpu_custom_call.1} parent=0 // pred_fallthru
    _
  // Predicated region
  $region26: #{tpu_custom_call.1} parent=0 // pred_check
    _
  $region27: #{tpu_custom_call.1} parent=0 // pred_check_branch
    %25 = sbr.rel (0) target = $region29
  $region28: #{tpu_custom_call.1} parent=0 // pred_region
    _
  $region29: #{tpu_custom_call.1} parent=0 // pred_fallthru
    _
  %v26 = vld [vmem:[%s1] sm:$0xff]
  %v27 = vld [vmem:[%s1 + $0x8] sm:$0xff]
  %v28 = vld [vmem:[%s3] sm:$0xff]
  %v29 = vld [vmem:[%s3 + $0x8] sm:$0xff]
  %v30 = vld [vmem:[%s3 + $0x10] sm:$0xff]
  %v31 = vld [vmem:[%s3 + $0x18] sm:$0xff]
  %v32 = vld [vmem:[%s3 + $0x20] sm:$0xff]
  %v33 = vld [vmem:[%s3 + $0x28] sm:$0xff]
  %v34 = vld [vmem:[%s3 + $0x30] sm:$0xff]
  %v35 = vld [vmem:[%s3 + $0x38] sm:$0xff]
  %v36 = vld [vmem:[%s5] sm:$0xff]
  %v37 = vld [vmem:[%s5 + $0x8] sm:$0xff]
  %v38 = vld [vmem:[%s5 + $0x10] sm:$0xff]
  %v39 = vld [vmem:[%s5 + $0x18] sm:$0xff]
  %v40 = vld [vmem:[%s2] sm:$0x1]
  %v42 = vlaneseq
  %v43 = vshrl.u32 %v42, 7
  %v44 = vsub.s32 0, %v43
  %v45 = vrot.slane %v40, %v44
  %v47 = vld [vmem:[%s4] sm:$0x1]
  %v49 = vlaneseq
  %v50 = vshrl.u32 %v49, 7
  %v51 = vsub.s32 0, %v50
  %v52 = vrot.slane %v47, %v51
  %v54 = vld [vmem:[%s6] sm:$0x1]
  %v56 = vlaneseq
  %v57 = vshrl.u32 %v56, 7
  %v58 = vsub.s32 0, %v57
  %v59 = vrot.slane %v54, %v58
  %v61 = vld [vmem:[%s0] sm:$0xff]
  %vm62 = vcmask 130048
  %v64 = vsel %vm62, %v61, 0
  %66 = vmatprep.subr.mxu0 0.0
  %67 = vmatpush1.msra.mxu0 %v26
  %68 = vmatprep.subr.mxu0 0.0
  %69 = vmatpush1.msra.mxu0 %v27
  %70 = vmatprep.subr.mxu0 0.0
  %71 = vmatpush1.msra.mxu0 0.0
  %72 = vmatprep.subr.mxu0 0.0
  %73 = vmatpush1.msra.mxu0 0.0
  %74 = vmatprep.subr.mxu0 0.0
  %75 = vmatpush1.msra.mxu0 0.0
  %76 = vmatprep.subr.mxu0 0.0
  %77 = vmatpush1.msra.mxu0 0.0
  %78 = vmatprep.subr.mxu0 0.0
  %79 = vmatpush1.msra.mxu0 0.0
  %80 = vmatprep.subr.mxu0 0.0
  %81 = vmatpush1.msra.mxu0 0.0
  %82 = vmatprep.subr.mxu0 0.0
  %83 = vmatpush1.msra.mxu0 0.0
  %84 = vmatprep.subr.mxu0 0.0
  %85 = vmatpush1.msra.mxu0 0.0
  %86 = vmatprep.subr.mxu0 0.0
  %87 = vmatpush1.msra.mxu0 0.0
  %88 = vmatprep.subr.mxu0 0.0
  %89 = vmatpush1.msra.mxu0 0.0
  %90 = vmatprep.subr.mxu0 0.0
  %91 = vmatpush1.msra.mxu0 0.0
  %92 = vmatprep.subr.mxu0 0.0
  %93 = vmatpush1.msra.mxu0 0.0
  %94 = vmatprep.subr.mxu0 0.0
  %95 = vmatpush1.msra.mxu0 0.0
  %96 = vmatprep.subr.mxu0 0.0
  %97 = vmatpush1.msra.mxu0 0.0
  %98 = vmatprep.subr.mxu0 0.0
  %99 = vmatpush1.msra.mxu0 0.0
  %100 = vmatprep.subr.mxu0 0.0
  %101 = vmatpush1.msra.mxu0 0.0
  %102 = vmatprep.subr.mxu0 0.0
  %103 = vmatpush1.msra.mxu0 0.0
  %104 = vmatprep.subr.mxu0 0.0
  %105 = vmatpush1.msra.mxu0 0.0
  %106 = vmatprep.subr.mxu0 0.0
  %107 = vmatpush1.msra.mxu0 0.0
  %108 = vmatprep.subr.mxu0 0.0
  %109 = vmatpush1.msra.mxu0 0.0
  %110 = vmatprep.subr.mxu0 0.0
  %111 = vmatpush1.msra.mxu0 0.0
  %112 = vmatprep.subr.mxu0 0.0
  %113 = vmatpush1.msra.mxu0 0.0
  %114 = vmatprep.subr.mxu0 0.0
  %115 = vmatpush1.msra.mxu0 0.0
  %116 = vmatprep.subr.mxu0 0.0
  %117 = vmatpush1.msra.mxu0 0.0
  %118 = vmatprep.subr.mxu0 0.0
  %119 = vmatpush1.msra.mxu0 0.0
  %120 = vmatprep.subr.mxu0 0.0
  %121 = vmatpush1.msra.mxu0 0.0
  %122 = vmatprep.subr.mxu0 0.0
  %123 = vmatpush1.msra.mxu0 0.0
  %124 = vmatprep.subr.mxu0 0.0
  %125 = vmatpush1.msra.mxu0 0.0
  %126 = vmatprep.subr.mxu0 0.0
  %127 = vmatpush1.msra.mxu0 0.0
  %128 = vmatprep.subr.mxu0 0.0
  %129 = vmatpush1.msra.mxu0 0.0
  %130 = vmatprep.mubr.f32.mxu0 0.0
  %131 = vmatmul.mubr.f32.gmra.mrb[0].mxu0 %v64
  %v132 = vpop.f32.mrb[0].mxu0
  %v133 = vadd.f32 %v45, %v132
  %v134 = vpop.f32.mrb[0].mxu0
  %135 = vdwg.mxu0
  %v136 = vmax.f32 %v133, 0.0
  %vm137 = vcmask 523264
  %v139 = vsel %vm137, %v136, 0
  %141 = vmatprep.subr.mxu0 0.0
  %142 = vmatpush1.msra.mxu0 %v28
  %143 = vmatprep.subr.mxu0 0.0
  %144 = vmatpush1.msra.mxu0 %v29
  %145 = vmatprep.subr.mxu0 0.0
  %146 = vmatpush1.msra.mxu0 %v30
  %147 = vmatprep.subr.mxu0 0.0
  %148 = vmatpush1.msra.mxu0 %v31
  %149 = vmatprep.subr.mxu0 0.0
  %150 = vmatpush1.msra.mxu0 %v32
  %151 = vmatprep.subr.mxu0 0.0
  %152 = vmatpush1.msra.mxu0 %v33
  %153 = vmatprep.subr.mxu0 0.0
  %154 = vmatpush1.msra.mxu0 %v34
  %155 = vmatprep.subr.mxu0 0.0
  %156 = vmatpush1.msra.mxu0 %v35
  %157 = vmatprep.subr.mxu0 0.0
  %158 = vmatpush1.msra.mxu0 0.0
  %159 = vmatprep.subr.mxu0 0.0
  %160 = vmatpush1.msra.mxu0 0.0
  %161 = vmatprep.subr.mxu0 0.0
  %162 = vmatpush1.msra.mxu0 0.0
  %163 = vmatprep.subr.mxu0 0.0
  %164 = vmatpush1.msra.mxu0 0.0
  %165 = vmatprep.subr.mxu0 0.0
  %166 = vmatpush1.msra.mxu0 0.0
  %167 = vmatprep.subr.mxu0 0.0
  %168 = vmatpush1.msra.mxu0 0.0
  %169 = vmatprep.subr.mxu0 0.0
  %170 = vmatpush1.msra.mxu0 0.0
  %171 = vmatprep.subr.mxu0 0.0
  %172 = vmatpush1.msra.mxu0 0.0
  %173 = vmatprep.subr.mxu0 0.0
  %174 = vmatpush1.msra.mxu0 0.0
  %175 = vmatprep.subr.mxu0 0.0
  %176 = vmatpush1.msra.mxu0 0.0
  %177 = vmatprep.subr.mxu0 0.0
  %178 = vmatpush1.msra.mxu0 0.0
  %179 = vmatprep.subr.mxu0 0.0
  %180 = vmatpush1.msra.mxu0 0.0
  %181 = vmatprep.subr.mxu0 0.0
  %182 = vmatpush1.msra.mxu0 0.0
  %183 = vmatprep.subr.mxu0 0.0
  %184 = vmatpush1.msra.mxu0 0.0
  %185 = vmatprep.subr.mxu0 0.0
  %186 = vmatpush1.msra.mxu0 0.0
  %187 = vmatprep.subr.mxu0 0.0
  %188 = vmatpush1.msra.mxu0 0.0
  %189 = vmatprep.subr.mxu0 0.0
  %190 = vmatpush1.msra.mxu0 0.0
  %191 = vmatprep.subr.mxu0 0.0
  %192 = vmatpush1.msra.mxu0 0.0
  %193 = vmatprep.subr.mxu0 0.0
  %194 = vmatpush1.msra.mxu0 0.0
  %195 = vmatprep.subr.mxu0 0.0
  %196 = vmatpush1.msra.mxu0 0.0
  %197 = vmatprep.subr.mxu0 0.0
  %198 = vmatpush1.msra.mxu0 0.0
  %199 = vmatprep.subr.mxu0 0.0
  %200 = vmatpush1.msra.mxu0 0.0
  %201 = vmatprep.subr.mxu0 0.0
  %202 = vmatpush1.msra.mxu0 0.0
  %203 = vmatprep.subr.mxu0 0.0
  %204 = vmatpush1.msra.mxu0 0.0
  %205 = vmatprep.mubr.f32.mxu0 0.0
  %206 = vmatmul.mubr.f32.gmra.mrb[0].mxu0 %v139
  %v207 = vpop.f32.mrb[0].mxu0
  %v208 = vadd.f32 %v52, %v207
  %v209 = vpop.f32.mrb[0].mxu0
  %210 = vdwg.mxu0
  %v211 = vmax.f32 %v208, 0.0
  %vm212 = vcmask 261120
  %v214 = vsel %vm212, %v211, 0
  %216 = vmatprep.subr.mxu0 0.0
  %217 = vmatpush1.msra.mxu0 %v36
  %218 = vmatprep.subr.mxu0 0.0
  %219 = vmatpush1.msra.mxu0 %v37
  %220 = vmatprep.subr.mxu0 0.0
  %221 = vmatpush1.msra.mxu0 %v38
  %222 = vmatprep.subr.mxu0 0.0
  %223 = vmatpush1.msra.mxu0 %v39
  %224 = vmatprep.subr.mxu0 0.0
  %225 = vmatpush1.msra.mxu0 0.0
  %226 = vmatprep.subr.mxu0 0.0
  %227 = vmatpush1.msra.mxu0 0.0
  %228 = vmatprep.subr.mxu0 0.0
  %229 = vmatpush1.msra.mxu0 0.0
  %230 = vmatprep.subr.mxu0 0.0
  %231 = vmatpush1.msra.mxu0 0.0
  %232 = vmatprep.subr.mxu0 0.0
  %233 = vmatpush1.msra.mxu0 0.0
  %234 = vmatprep.subr.mxu0 0.0
  %235 = vmatpush1.msra.mxu0 0.0
  %236 = vmatprep.subr.mxu0 0.0
  %237 = vmatpush1.msra.mxu0 0.0
  %238 = vmatprep.subr.mxu0 0.0
  %239 = vmatpush1.msra.mxu0 0.0
  %240 = vmatprep.subr.mxu0 0.0
  %241 = vmatpush1.msra.mxu0 0.0
  %242 = vmatprep.subr.mxu0 0.0
  %243 = vmatpush1.msra.mxu0 0.0
  %244 = vmatprep.subr.mxu0 0.0
  %245 = vmatpush1.msra.mxu0 0.0
  %246 = vmatprep.subr.mxu0 0.0
  %247 = vmatpush1.msra.mxu0 0.0
  %248 = vmatprep.subr.mxu0 0.0
  %249 = vmatpush1.msra.mxu0 0.0
  %250 = vmatprep.subr.mxu0 0.0
  %251 = vmatpush1.msra.mxu0 0.0
  %252 = vmatprep.subr.mxu0 0.0
  %253 = vmatpush1.msra.mxu0 0.0
  %254 = vmatprep.subr.mxu0 0.0
  %255 = vmatpush1.msra.mxu0 0.0
  %256 = vmatprep.subr.mxu0 0.0
  %257 = vmatpush1.msra.mxu0 0.0
  %258 = vmatprep.subr.mxu0 0.0
  %259 = vmatpush1.msra.mxu0 0.0
  %260 = vmatprep.subr.mxu0 0.0
  %261 = vmatpush1.msra.mxu0 0.0
  %262 = vmatprep.subr.mxu0 0.0
  %263 = vmatpush1.msra.mxu0 0.0
  %264 = vmatprep.subr.mxu0 0.0
  %265 = vmatpush1.msra.mxu0 0.0
  %266 = vmatprep.subr.mxu0 0.0
  %267 = vmatpush1.msra.mxu0 0.0
  %268 = vmatprep.subr.mxu0 0.0
  %269 = vmatpush1.msra.mxu0 0.0
  %270 = vmatprep.subr.mxu0 0.0
  %271 = vmatpush1.msra.mxu0 0.0
  %272 = vmatprep.subr.mxu0 0.0
  %273 = vmatpush1.msra.mxu0 0.0
  %274 = vmatprep.subr.mxu0 0.0
  %275 = vmatpush1.msra.mxu0 0.0
  %276 = vmatprep.subr.mxu0 0.0
  %277 = vmatpush1.msra.mxu0 0.0
  %278 = vmatprep.subr.mxu0 0.0
  %279 = vmatpush1.msra.mxu0 0.0
  %280 = vmatprep.mubr.f32.mxu0 0.0
  %281 = vmatmul.mubr.f32.gmra.mrb[0].mxu0 %v214
  %v282 = vpop.f32.mrb[0].mxu0
  %v283 = vadd.f32 %v59, %v282
  %v284 = vpop.f32.mrb[0].mxu0
  %285 = vdwg.mxu0
  %vm286 = vcmask 31744
  %287 = vst.msk [vmem:[%s7] sm:$0xff] %vm286, %v283
  // Predicated region
  $region30: #{tpu_custom_call.1} parent=0 // pred_check
    _
  $region31: #{tpu_custom_call.1} parent=0 // pred_check_branch
    %289 = sbr.rel (0) target = $region33
  $region32: #{tpu_custom_call.1} parent=0 // pred_region
    _
  $region33: #{tpu_custom_call.1} parent=0 // pred_fallthru
    _
  // Predicated region
  $region34: #{tpu_custom_call.1} parent=0 // pred_check
    _
  $region35: #{tpu_custom_call.1} parent=0 // pred_check_branch
    %291 = sbr.rel (0) target = $region37
  $region36: #{tpu_custom_call.1} parent=0 // pred_region
    _
  $region37: #{tpu_custom_call.1} parent=0 // pred_fallthru
    _

</llo_original>
